<compile_context>
chip_gen: v7x
topology: tpu7x:2x2x1
jax: 0.10.0
libtpu: 0.0.40
codegen_flags: <defaults>
</compile_context>

<pallas_src>
import math
from functools import partial

import jax
import jax.numpy as jnp
import numpy as np
from jax.experimental import pallas as pl
from jax.experimental.pallas import tpu as pltpu


# ---------------------------------------------------------------------------
# Pallas kernel: fused CondScale forward
# ---------------------------------------------------------------------------
def cond_scale_kernel(w_ref, c_ref, wa_ref, ba_ref, wc_ref, o_ref, *, wa_gain, wc_gain):
    # w_ref:  (BT, w_dim)   latent rows
    # c_ref:  (BT, c_dim)   condition rows
    # wa_ref: (w_dim, Cp)   w_affine weight, pre-transposed, channel-padded
    # ba_ref: (1, Cp)       w_affine bias (bias_init = 1), channel-padded
    # wc_ref: (c_dim, Cp)   c_to_scales weight, pre-transposed (no bias)
    # o_ref:  (BT, Cp)      styles * scales   (lane-dense store)
    styles = jnp.dot(w_ref[...], wa_ref[...], preferred_element_type=jnp.float32)
    styles = styles * wa_gain + ba_ref[...]
    scales = jnp.dot(c_ref[...], wc_ref[...], preferred_element_type=jnp.float32)
    scales = scales * wc_gain
    o_ref[...] = (styles * scales).astype(o_ref.dtype)


# ---------------------------------------------------------------------------
# Wrapper
# ---------------------------------------------------------------------------
def _round_up(x, m):
    return ((x + m - 1) // m) * m


def cond_scale_forward(w, c, wa, ba, wc, *, wa_gain, wc_gain):
    """CondScale.forward for the cond_args.type == 'fourier' path with w given.

    w:  (B, w_dim)            latent codes
    c:  (B, c_dim)            conditions
    wa: (channels, w_dim)     self.w_affine.weight      (PyTorch layout)
    ba: (channels,)           self.w_affine.bias
    wc: (channels, c_dim)     self.c_to_scales.weight   (no bias)
    wa_gain / wc_gain: static FullyConnectedLayer weight gains
                       (lr_multiplier / sqrt(in_features)).
    """
    # TODO(synk): the optional branches of CondScale.forward (w is None, or
    # cond_args.type != 'fourier') degenerate to a single FC matmul and are not
    # wired here; only the main fused 'fourier'+w path is implemented.
    B, w_dim = w.shape
    _, c_dim = c.shape
    C = wa.shape[0]

    # Lane-dense / MXU-aligned padding: channels -> x128 (lanes), rows -> x8.
    Cp = _round_up(C, 128)
    Bp = _round_up(max(B, 8), 8)
    BT = 256
    if Bp <= BT:
        BT = Bp
    else:
        Bp = _round_up(Bp, BT)

    f32 = jnp.float32
    wp = jnp.zeros((Bp, w_dim), f32).at[:B].set(w.astype(f32))
    cp = jnp.zeros((Bp, c_dim), f32).at[:B].set(c.astype(f32))
    wa_t = jnp.zeros((w_dim, Cp), f32).at[:, :C].set(wa.astype(f32).T)
    wc_t = jnp.zeros((c_dim, Cp), f32).at[:, :C].set(wc.astype(f32).T)
    ba_p = jnp.zeros((1, Cp), f32).at[0, :C].set(ba.astype(f32))

    kernel = partial(cond_scale_kernel, wa_gain=wa_gain, wc_gain=wc_gain)
    out = pl.pallas_call(
        kernel,
        out_shape=jax.ShapeDtypeStruct((Bp, Cp), f32),
        grid=(Bp // BT,),
        in_specs=[
            pl.BlockSpec((BT, w_dim), lambda i: (i, 0)),
            pl.BlockSpec((BT, c_dim), lambda i: (i, 0)),
            pl.BlockSpec((w_dim, Cp), lambda i: (0, 0)),
            pl.BlockSpec((1, Cp), lambda i: (0, 0)),
            pl.BlockSpec((c_dim, Cp), lambda i: (0, 0)),
        ],
        out_specs=pl.BlockSpec((BT, Cp), lambda i: (i, 0)),
        compiler_params=pltpu.CompilerParams(dimension_semantics=("parallel",)),
    )(wp, cp, wa_t, ba_p, wc_t)
    return out[:B, :C]


# ---------------------------------------------------------------------------
# Pure-JAX reference (for correctness check)
# ---------------------------------------------------------------------------
def ref_forward(w, c, wa, ba, wc, wa_gain, wc_gain):
    styles = jnp.dot(w, (wa * wa_gain).T, precision=jax.lax.Precision.HIGHEST) + ba
    scales = jnp.dot(c, (wc * wc_gain).T, precision=jax.lax.Precision.HIGHEST)
    return styles * scales


# ---------------------------------------------------------------------------
if __name__ == "__main__":
    # Small shapes consistent with the module: batch=2, w_dim=32, c_dim=8,
    # channels=128 (lane-dense), cond_args = (type='fourier', lr=0.1).
    B, w_dim, c_dim, channels = 2, 32, 8, 128
    cond_lr = 0.1

    key = jax.random.PRNGKey(0)
    k = jax.random.split(key, 4)

    # Parameters, matching PyTorch FullyConnectedLayer / CondScale init:
    #   w_affine:    weight = randn(channels, w_dim) / 1,  bias = 1 (bias_init=1)
    #   c_to_scales: weight = randn(channels, c_dim) / lr, then *=1e-6, [:,0]+=1
    wa = jax.random.normal(k[0], (channels, w_dim), jnp.float32)
    ba = jnp.full((channels,), 1.0, jnp.float32)
    wc = (jax.random.normal(k[1], (channels, c_dim), jnp.float32) / cond_lr) * 1e-6
    wc = wc.at[:, 0].add(1.0)

    # Static weight gains: lr_multiplier / sqrt(in_features); bias_gain for
    # w_affine is 1 (lr_multiplier=1) so the bias is used as-is.
    wa_gain = 1.0 / math.sqrt(w_dim)
    wc_gain = cond_lr / math.sqrt(c_dim)

    # Inputs.
    w = jax.random.normal(k[2], (B, w_dim), jnp.float32)
    c = jax.random.normal(k[3], (B, c_dim), jnp.float32)

    fwd = jax.jit(partial(cond_scale_forward, wa_gain=wa_gain, wc_gain=wc_gain))
    out = jax.block_until_ready(fwd(w, c, wa, ba, wc))

    ref = jax.block_until_ready(ref_forward(w, c, wa, ba, wc, wa_gain, wc_gain))

    assert out.shape == (B, channels), out.shape
    np.testing.assert_allclose(np.asarray(out), np.asarray(ref), rtol=1e-3, atol=1e-3)
    print("KERNEL_OK")
</pallas_src>

<mosaic_0001>
module attributes {stable_mosaic.version = 11 : i64} {
  func.func @cond_scale_kernel(%arg0: i32, %arg1: memref<8x32xf32, #tpu.memory_space<vmem>>, %arg2: memref<8x8xf32, #tpu.memory_space<vmem>>, %arg3: memref<32x128xf32, #tpu.memory_space<vmem>>, %arg4: memref<1x128xf32, #tpu.memory_space<vmem>>, %arg5: memref<8x128xf32, #tpu.memory_space<vmem>>, %arg6: memref<8x128xf32, #tpu.memory_space<vmem>>) attributes {dimension_semantics = [#tpu.dimension_semantics<parallel>], iteration_bounds = array<i64: 1>, scalar_prefetch = 0 : i64, scratch_operands = 0 : i64, tpu.core_type = #tpu.core_type<tc>, window_params = [{transform_indices = @transform_0, window_bounds = array<i64: 8, 32>}, {transform_indices = @transform_1, window_bounds = array<i64: 8, 8>}, {pipeline_mode = #tpu.pipeline_mode<synchronous>, transform_indices = @transform_2, window_bounds = array<i64: 32, 128>}, {pipeline_mode = #tpu.pipeline_mode<synchronous>, transform_indices = @transform_3, window_bounds = array<i64: 1, 128>}, {pipeline_mode = #tpu.pipeline_mode<synchronous>, transform_indices = @transform_4, window_bounds = array<i64: 8, 128>}, {transform_indices = @transform_5, window_bounds = array<i64: 8, 128>}]} {
    %c0 = arith.constant 0 : index
    %c0_0 = arith.constant 0 : index
    %0 = vector.load %arg1[%c0, %c0_0] : memref<8x32xf32, #tpu.memory_space<vmem>>, vector<8x32xf32>
    %c0_1 = arith.constant 0 : index
    %c0_2 = arith.constant 0 : index
    %1 = vector.load %arg3[%c0_1, %c0_2] : memref<32x128xf32, #tpu.memory_space<vmem>>, vector<32x128xf32>
    %cst = arith.constant dense<0.000000e+00> : vector<8x128xf32>
    %2 = tpu.matmul %0, %1, %cst {dimension_numbers = #tpu.dot_dimension_numbers<[1], [0], [0], [1], [0, 0, 1, 1], [], []>} : vector<8x32xf32>, vector<32x128xf32>, vector<8x128xf32> -> vector<8x128xf32>
    %cst_3 = arith.constant 0.176776692 : f32
    %3 = vector.broadcast %cst_3 : f32 to vector<8x128xf32>
    %4 = arith.mulf %2, %3 : vector<8x128xf32>
    %c0_4 = arith.constant 0 : index
    %c0_5 = arith.constant 0 : index
    %5 = vector.load %arg4[%c0_4, %c0_5] : memref<1x128xf32, #tpu.memory_space<vmem>>, vector<1x128xf32>
    %6 = vector.broadcast %5 : vector<1x128xf32> to vector<8x128xf32>
    %7 = arith.addf %4, %6 : vector<8x128xf32>
    %c0_6 = arith.constant 0 : index
    %c0_7 = arith.constant 0 : index
    %8 = vector.load %arg2[%c0_6, %c0_7] : memref<8x8xf32, #tpu.memory_space<vmem>>, vector<8x8xf32>
    %c0_8 = arith.constant 0 : index
    %c0_9 = arith.constant 0 : index
    %9 = vector.load %arg5[%c0_8, %c0_9] : memref<8x128xf32, #tpu.memory_space<vmem>>, vector<8x128xf32>
    %cst_10 = arith.constant dense<0.000000e+00> : vector<8x128xf32>
    %10 = tpu.matmul %8, %9, %cst_10 {dimension_numbers = #tpu.dot_dimension_numbers<[1], [0], [0], [1], [0, 0, 1, 1], [], []>} : vector<8x8xf32>, vector<8x128xf32>, vector<8x128xf32> -> vector<8x128xf32>
    %cst_11 = arith.constant 0.0353553407 : f32
    %11 = vector.broadcast %cst_11 : f32 to vector<8x128xf32>
    %12 = arith.mulf %10, %11 : vector<8x128xf32>
    %13 = arith.mulf %7, %12 : vector<8x128xf32>
    %c0_12 = arith.constant 0 : index
    %c0_13 = arith.constant 0 : index
    %14 = vector.load %arg6[%c0_12, %c0_13] : memref<8x128xf32, #tpu.memory_space<vmem>>, vector<8x128xf32>
    tpu.vector_store %arg6[%c0_12, %c0_13], %13 {strides = array<i32>} : memref<8x128xf32, #tpu.memory_space<vmem>>, vector<8x128xf32>,
    return
  }
  func.func @transform_0(%arg0: i32) -> (i32, i32) {
    %c0_i32 = arith.constant 0 : i32
    %c0_i32_0 = arith.constant 0 : i32
    return %arg0, %c0_i32 : i32, i32
  }
  func.func @transform_1(%arg0: i32) -> (i32, i32) {
    %c0_i32 = arith.constant 0 : i32
    %c0_i32_0 = arith.constant 0 : i32
    return %arg0, %c0_i32 : i32, i32
  }
  func.func @transform_2(%arg0: i32) -> (i32, i32) {
    %c0_i32 = arith.constant 0 : i32
    %c0_i32_0 = arith.constant 0 : i32
    %c0_i32_1 = arith.constant 0 : i32
    return %c0_i32, %c0_i32_0 : i32, i32
  }
  func.func @transform_3(%arg0: i32) -> (i32, i32) {
    %c0_i32 = arith.constant 0 : i32
    %c0_i32_0 = arith.constant 0 : i32
    %c0_i32_1 = arith.constant 0 : i32
    return %c0_i32, %c0_i32_0 : i32, i32
  }
  func.func @transform_4(%arg0: i32) -> (i32, i32) {
    %c0_i32 = arith.constant 0 : i32
    %c0_i32_0 = arith.constant 0 : i32
    %c0_i32_1 = arith.constant 0 : i32
    return %c0_i32, %c0_i32_0 : i32, i32
  }
  func.func @transform_5(%arg0: i32) -> (i32, i32) {
    %c0_i32 = arith.constant 0 : i32
    %c0_i32_0 = arith.constant 0 : i32
    return %arg0, %c0_i32 : i32, i32
  }
}

</mosaic_0001>

<llo_original>
// kernel: cond_scale_forward.1
$region0: #{cond_scale_forward.1}
  #allocation0 [shape = 'u32[]', space=smem, size = 0x4, offset = 0x4, fixed_abs, tag = 'smem constant byte address 0x4 - core index']
  #allocation1 [shape = 'u32[144,128]{1,0:T(1,128)}', space=vmem, size = 0x12000, scoped, tag = 'internal scratch']
  %s0 = inlined_call_operand.vmem [shape: f32[8,32], index: 0, kind: input, shape index: {}]
  %s1 = inlined_call_operand.vmem [shape: f32[8,8], index: 1, kind: input, shape index: {}]
  %s2 = inlined_call_operand.vmem [shape: f32[32,128], index: 2, kind: input, shape index: {}]
  %s3 = inlined_call_operand.vmem [shape: f32[1,128], index: 3, kind: input, shape index: {}]
  %s4 = inlined_call_operand.vmem [shape: f32[8,128], index: 4, kind: input, shape index: {}]
  %s5 = inlined_call_operand.vmem [shape: f32[8,128], index: 5, kind: output, shape index: {}]
  %s6 = sld [smem:[#allocation0]]
  $region30: #{cond_scale_forward.1} parent=0
    _
  %s8 = ssub.s32 1, %s6
  %s9 = scalar_select 0, %s8, %s6
  // Predicated region
  $region2: #{cond_scale_forward.1} parent=0 // pred_check
    _
  $region3: #{cond_scale_forward.1} parent=0 // pred_check_branch
    %11 = sbr.rel (0) target = $region5
  $region4: #{cond_scale_forward.1} parent=0 // pred_region
    _
  $region5: #{cond_scale_forward.1} parent=0 // pred_fallthru
    _
  // Predicated region
  $region6: #{cond_scale_forward.1} parent=0 // pred_check
    _
  $region7: #{cond_scale_forward.1} parent=0 // pred_check_branch
    %13 = sbr.rel (0) target = $region9
  $region8: #{cond_scale_forward.1} parent=0 // pred_region
    _
  $region9: #{cond_scale_forward.1} parent=0 // pred_fallthru
    _
  // Predicated region
  $region10: #{cond_scale_forward.1} parent=0 // pred_check
    _
  $region11: #{cond_scale_forward.1} parent=0 // pred_check_branch
    %15 = sbr.rel (0) target = $region13
  $region12: #{cond_scale_forward.1} parent=0 // pred_region
    _
  $region13: #{cond_scale_forward.1} parent=0 // pred_fallthru
    _
  // Predicated region
  $region14: #{cond_scale_forward.1} parent=0 // pred_check
    _
  $region15: #{cond_scale_forward.1} parent=0 // pred_check_branch
    %17 = sbr.rel (0) target = $region17
  $region16: #{cond_scale_forward.1} parent=0 // pred_region
    _
  $region17: #{cond_scale_forward.1} parent=0 // pred_fallthru
    _
  // Predicated region
  $region18: #{cond_scale_forward.1} parent=0 // pred_check
    _
  $region19: #{cond_scale_forward.1} parent=0 // pred_check_branch
    %19 = sbr.rel (0) target = $region21
  $region20: #{cond_scale_forward.1} parent=0 // pred_region
    _
  $region21: #{cond_scale_forward.1} parent=0 // pred_fallthru
    _
  %v20 = vld [vmem:[%s0] sm:$0xff]
  %v21 = vld [vmem:[%s2] sm:$0xff]
  %v22 = vld [vmem:[%s2 + $0x8] sm:$0xff]
  %v23 = vld [vmem:[%s2 + $0x10] sm:$0xff]
  %v24 = vld [vmem:[%s2 + $0x18] sm:$0xff]
  %vm25 = vcmask 261120
  %v27 = vsel %vm25, %v20, 0
  %29 = vmatprep.subr.mxu0 0.0
  %30 = vmatpush1.msra.mxu0 %v21
  %31 = vmatprep.subr.mxu0 0.0
  %32 = vmatpush1.msra.mxu0 %v22
  %33 = vmatprep.subr.mxu0 0.0
  %34 = vmatpush1.msra.mxu0 %v23
  %35 = vmatprep.subr.mxu0 0.0
  %36 = vmatpush1.msra.mxu0 %v24
  %37 = vmatprep.subr.mxu0 0.0
  %38 = vmatpush1.msra.mxu0 0.0
  %39 = vmatprep.subr.mxu0 0.0
  %40 = vmatpush1.msra.mxu0 0.0
  %41 = vmatprep.subr.mxu0 0.0
  %42 = vmatpush1.msra.mxu0 0.0
  %43 = vmatprep.subr.mxu0 0.0
  %44 = vmatpush1.msra.mxu0 0.0
  %45 = vmatprep.subr.mxu0 0.0
  %46 = vmatpush1.msra.mxu0 0.0
  %47 = vmatprep.subr.mxu0 0.0
  %48 = vmatpush1.msra.mxu0 0.0
  %49 = vmatprep.subr.mxu0 0.0
  %50 = vmatpush1.msra.mxu0 0.0
  %51 = vmatprep.subr.mxu0 0.0
  %52 = vmatpush1.msra.mxu0 0.0
  %53 = vmatprep.subr.mxu0 0.0
  %54 = vmatpush1.msra.mxu0 0.0
  %55 = vmatprep.subr.mxu0 0.0
  %56 = vmatpush1.msra.mxu0 0.0
  %57 = vmatprep.subr.mxu0 0.0
  %58 = vmatpush1.msra.mxu0 0.0
  %59 = vmatprep.subr.mxu0 0.0
  %60 = vmatpush1.msra.mxu0 0.0
  %61 = vmatprep.subr.mxu0 0.0
  %62 = vmatpush1.msra.mxu0 0.0
  %63 = vmatprep.subr.mxu0 0.0
  %64 = vmatpush1.msra.mxu0 0.0
  %65 = vmatprep.subr.mxu0 0.0
  %66 = vmatpush1.msra.mxu0 0.0
  %67 = vmatprep.subr.mxu0 0.0
  %68 = vmatpush1.msra.mxu0 0.0
  %69 = vmatprep.subr.mxu0 0.0
  %70 = vmatpush1.msra.mxu0 0.0
  %71 = vmatprep.subr.mxu0 0.0
  %72 = vmatpush1.msra.mxu0 0.0
  %73 = vmatprep.subr.mxu0 0.0
  %74 = vmatpush1.msra.mxu0 0.0
  %75 = vmatprep.subr.mxu0 0.0
  %76 = vmatpush1.msra.mxu0 0.0
  %77 = vmatprep.subr.mxu0 0.0
  %78 = vmatpush1.msra.mxu0 0.0
  %79 = vmatprep.subr.mxu0 0.0
  %80 = vmatpush1.msra.mxu0 0.0
  %81 = vmatprep.subr.mxu0 0.0
  %82 = vmatpush1.msra.mxu0 0.0
  %83 = vmatprep.subr.mxu0 0.0
  %84 = vmatpush1.msra.mxu0 0.0
  %85 = vmatprep.subr.mxu0 0.0
  %86 = vmatpush1.msra.mxu0 0.0
  %87 = vmatprep.subr.mxu0 0.0
  %88 = vmatpush1.msra.mxu0 0.0
  %89 = vmatprep.subr.mxu0 0.0
  %90 = vmatpush1.msra.mxu0 0.0
  %91 = vmatprep.subr.mxu0 0.0
  %92 = vmatpush1.msra.mxu0 0.0
  %93 = vmatprep.mubr.f32.mxu0 0.0
  %94 = vmatmul.mubr.f32.gmra.mrb[0].mxu0 %v27
  %v95 = vpop.f32.mrb[0].mxu0
  %v96 = vadd.f32 0.0, %v95
  %v97 = vpop.f32.mrb[0].mxu0
  %98 = vdwg.mxu0
  %v99 = vmul.f32 %v96, 0.17677669
  %v100 = vld [vmem:[%s3] sm:$0x1]
  %v102 = vlaneseq
  %v103 = vshrl.u32 %v102, 7
  %v104 = vsub.s32 0, %v103
  %v105 = vrot.slane %v100, %v104
  %v107 = vadd.f32 %v99, %v105
  %v108 = vld [vmem:[%s1] sm:$0xff]
  %v109 = vld [vmem:[%s4] sm:$0xff]
  %vm110 = vcmask 64512
  %v112 = vsel %vm110, %v108, 0
  %114 = vmatprep.subr.mxu0 0.0
  %115 = vmatpush1.msra.mxu0 %v109
  %116 = vmatprep.subr.mxu0 0.0
  %117 = vmatpush1.msra.mxu0 0.0
  %118 = vmatprep.subr.mxu0 0.0
  %119 = vmatpush1.msra.mxu0 0.0
  %120 = vmatprep.subr.mxu0 0.0
  %121 = vmatpush1.msra.mxu0 0.0
  %122 = vmatprep.subr.mxu0 0.0
  %123 = vmatpush1.msra.mxu0 0.0
  %124 = vmatprep.subr.mxu0 0.0
  %125 = vmatpush1.msra.mxu0 0.0
  %126 = vmatprep.subr.mxu0 0.0
  %127 = vmatpush1.msra.mxu0 0.0
  %128 = vmatprep.subr.mxu0 0.0
  %129 = vmatpush1.msra.mxu0 0.0
  %130 = vmatprep.subr.mxu0 0.0
  %131 = vmatpush1.msra.mxu0 0.0
  %132 = vmatprep.subr.mxu0 0.0
  %133 = vmatpush1.msra.mxu0 0.0
  %134 = vmatprep.subr.mxu0 0.0
  %135 = vmatpush1.msra.mxu0 0.0
  %136 = vmatprep.subr.mxu0 0.0
  %137 = vmatpush1.msra.mxu0 0.0
  %138 = vmatprep.subr.mxu0 0.0
  %139 = vmatpush1.msra.mxu0 0.0
  %140 = vmatprep.subr.mxu0 0.0
  %141 = vmatpush1.msra.mxu0 0.0
  %142 = vmatprep.subr.mxu0 0.0
  %143 = vmatpush1.msra.mxu0 0.0
  %144 = vmatprep.subr.mxu0 0.0
  %145 = vmatpush1.msra.mxu0 0.0
  %146 = vmatprep.subr.mxu0 0.0
  %147 = vmatpush1.msra.mxu0 0.0
  %148 = vmatprep.subr.mxu0 0.0
  %149 = vmatpush1.msra.mxu0 0.0
  %150 = vmatprep.subr.mxu0 0.0
  %151 = vmatpush1.msra.mxu0 0.0
  %152 = vmatprep.subr.mxu0 0.0
  %153 = vmatpush1.msra.mxu0 0.0
  %154 = vmatprep.subr.mxu0 0.0
  %155 = vmatpush1.msra.mxu0 0.0
  %156 = vmatprep.subr.mxu0 0.0
  %157 = vmatpush1.msra.mxu0 0.0
  %158 = vmatprep.subr.mxu0 0.0
  %159 = vmatpush1.msra.mxu0 0.0
  %160 = vmatprep.subr.mxu0 0.0
  %161 = vmatpush1.msra.mxu0 0.0
  %162 = vmatprep.subr.mxu0 0.0
  %163 = vmatpush1.msra.mxu0 0.0
  %164 = vmatprep.subr.mxu0 0.0
  %165 = vmatpush1.msra.mxu0 0.0
  %166 = vmatprep.subr.mxu0 0.0
  %167 = vmatpush1.msra.mxu0 0.0
  %168 = vmatprep.subr.mxu0 0.0
  %169 = vmatpush1.msra.mxu0 0.0
  %170 = vmatprep.subr.mxu0 0.0
  %171 = vmatpush1.msra.mxu0 0.0
  %172 = vmatprep.subr.mxu0 0.0
  %173 = vmatpush1.msra.mxu0 0.0
  %174 = vmatprep.subr.mxu0 0.0
  %175 = vmatpush1.msra.mxu0 0.0
  %176 = vmatprep.subr.mxu0 0.0
  %177 = vmatpush1.msra.mxu0 0.0
  %178 = vmatprep.mubr.f32.mxu0 0.0
  %179 = vmatmul.mubr.f32.gmra.mrb[0].mxu0 %v112
  %v180 = vpop.f32.mrb[0].mxu0
  %v181 = vadd.f32 0.0, %v180
  %v182 = vpop.f32.mrb[0].mxu0
  %183 = vdwg.mxu0
  %v184 = vmul.f32 %v181, 0.03535534
  %v185 = vmul.f32 %v107, %v184
  %186 = vst [vmem:[%s5] sm:$0xff] %v185
  // Predicated region
  $region22: #{cond_scale_forward.1} parent=0 // pred_check
    _
  $region23: #{cond_scale_forward.1} parent=0 // pred_check_branch
    %188 = sbr.rel (0) target = $region25
  $region24: #{cond_scale_forward.1} parent=0 // pred_region
    _
  $region25: #{cond_scale_forward.1} parent=0 // pred_fallthru
    _
  // Predicated region
  $region26: #{cond_scale_forward.1} parent=0 // pred_check
    _
  $region27: #{cond_scale_forward.1} parent=0 // pred_check_branch
    %190 = sbr.rel (0) target = $region29
  $region28: #{cond_scale_forward.1} parent=0 // pred_region
    _
  $region29: #{cond_scale_forward.1} parent=0 // pred_fallthru
    _

</llo_original>
